<compile_context>
chip_gen: v6e
topology: v6e:2x2x1
jax: 0.10.0
libtpu: 0.0.40
codegen_flags: <defaults>
</compile_context>

<pallas_src>
import jax
import jax.numpy as jnp
from jax import lax
from jax.experimental import pallas as pl
from jax.experimental.pallas import tpu as pltpu


SUB_LANES = 512  # in-kernel sub-chunk width (multiple of 128)


def pinn_kernel(x_ref, t_ref, w1_ref, b1_ref, w2_ref, b2_ref, w3_ref, b3_ref, o_ref):
    # Tiny parameters (grid-resident) -- load/slice once per grid step, hoisted
    # out of the sub-chunk loop.
    w1 = w1_ref[...]                 # (32, 2)  PyTorch (out, in) layout
    w1x = w1[:, 0:1]                 # (32, 1)  broadcasts along lanes
    w1t = w1[:, 1:2]                 # (32, 1)
    b1 = b1_ref[...]                 # (32, 1)
    w2 = w2_ref[...]                 # (32, 32)
    b2 = b2_ref[...]                 # (32, 1)
    w3c = w3_ref[...]                # (32, 1)  fc3 weights as a sublane column
    b3 = b3_ref[0]                   # scalar from SMEM

    tile_n = x_ref.shape[1]
    sub = min(SUB_LANES, tile_n)     # static; tile_n is a multiple of sub
    n_sub = tile_n // sub

    def body(j, carry):
        start = pl.multiple_of(j * sub, sub)
        x_row = x_ref[:, pl.ds(start, sub)]          # (1, sub)  batch on lanes
        t_row = t_ref[:, pl.ds(start, sub)]          # (1, sub)

        # fc1 (in=2): two VPU broadcast FMAs (skip the K=2 MXU round trip),
        # sigmoid on the EUP.
        h1 = jax.nn.sigmoid(w1x * x_row + w1t * t_row + b1)          # (32, sub)

        # fc2: (32, 32) @ (32, sub) on the MXU, bias broadcast along lanes, relu.
        h2 = jnp.dot(w2, h1, preferred_element_type=jnp.float32) + b2
        h2 = jnp.maximum(h2, 0.0)

        # fc3 (out=1): w3-weighted sublane reduction (VPU mul + XLU reduce)
        # instead of a second, nearly-empty MXU matmul.
        o = jnp.sum(w3c * h2, axis=0, keepdims=True) + b3            # (1, sub)

        o_ref[:, pl.ds(start, sub)] = o.astype(o_ref.dtype)          # dense store
        return carry

    lax.fori_loop(0, n_sub, body, 0, unroll=True)


def _round_up(a, m):
    return (a + m - 1) // m * m


def pinn_forward(x, t, params, *, tile_n=8192):
    """x, t: (N, 1) float32 (PyTorch layout).  Returns (N, 1) float32."""
    w1, b1, w2, b2, w3, b3 = params
    n = x.shape[0]

    # Batch tile: multiple of the in-kernel sub-chunk, large to amortize grid
    # step overhead, capped so it is VMEM-safe on every generation (v7x has
    # only 64 MiB physical VMEM).  For small batches don't overshoot N.
    tile_n = max(SUB_LANES, _round_up(tile_n, SUB_LANES))
    tile_n = min(tile_n, 32768)
    tile_n = min(tile_n, _round_up(n, SUB_LANES))
    grid = (pl.cdiv(n, tile_n),)

    # Metadata-only reshapes: (N, 1) and (1, N) share the same contiguous data,
    # so no extra HBM pass (no pad / slice round trip).  The ragged tail is
    # handled by Pallas boundary masking in the final grid block.
    x_row = x.astype(jnp.float32).reshape(1, n)
    t_row = t.astype(jnp.float32).reshape(1, n)

    b1_k = b1.reshape(32, 1).astype(jnp.float32)
    b2_k = b2.reshape(32, 1).astype(jnp.float32)
    w3_k = w3.reshape(32, 1).astype(jnp.float32)
    b3_k = b3.reshape(1).astype(jnp.float32)

    full = lambda i: (0, 0)  # whole (tiny) parameter tensor, resident across steps

    cost = pl.CostEstimate(
        flops=2 * n * (2 * 32 + 32 * 32 + 32),
        transcendentals=64 * n,  # sigmoid ~ exp + reciprocal per hidden unit
        bytes_accessed=n * 12 + (32 * 2 + 32 + 32 * 32 + 32 + 32 + 1) * 4,
    )

    # I/O working set: x/t/out rows, double-buffered (24 B per batch element per
    # tile) + resident params + (32, SUB_LANES) f32 activations.  Explicit limit
    # keeps large tiles portable across v5e (16 MiB) / v6e / v7x (32 MiB) scoped
    # VMEM defaults.
    vmem_limit = min(max(3 * 2 * tile_n * 4 + (2 << 20), 16 << 20), 48 << 20)

    out_row = pl.pallas_call(
        pinn_kernel,
        out_shape=jax.ShapeDtypeStruct((1, n), jnp.float32),
        grid=grid,
        in_specs=[
            pl.BlockSpec((1, tile_n), lambda i: (0, i)),               # x row tile
            pl.BlockSpec((1, tile_n), lambda i: (0, i)),               # t row tile
            pl.BlockSpec((32, 2), full),                               # w1
            pl.BlockSpec((32, 1), full),                               # b1
            pl.BlockSpec((32, 32), full),                              # w2
            pl.BlockSpec((32, 1), full),                               # b2
            pl.BlockSpec((32, 1), full),                               # w3 (column)
            pl.BlockSpec(memory_space=pltpu.MemorySpace.SMEM),         # b3 scalar
        ],
        out_specs=pl.BlockSpec((1, tile_n), lambda i: (0, i)),
        compiler_params=pltpu.CompilerParams(
            dimension_semantics=("parallel",),
            vmem_limit_bytes=vmem_limit,
        ),
        cost_estimate=cost,
    )(x_row, t_row, w1.astype(jnp.float32), b1_k, w2.astype(jnp.float32),
      b2_k, w3_k, b3_k)

    return out_row.reshape(n, 1)


def init_params(key):
    """PyTorch nn.Linear-style shapes (out, in) and U(-1/sqrt(fan_in), .) init."""
    ks = jax.random.split(key, 6)

    def uni(k, shape, fan_in):
        bound = 1.0 / jnp.sqrt(jnp.float32(fan_in))
        return jax.random.uniform(k, shape, jnp.float32, -bound, bound)

    w1 = uni(ks[0], (32, 2), 2.0)
    b1 = uni(ks[1], (32,), 2.0)
    w2 = uni(ks[2], (32, 32), 32.0)
    b2 = uni(ks[3], (32,), 32.0)
    w3 = uni(ks[4], (1, 32), 32.0)
    b3 = uni(ks[5], (1,), 32.0)
    return (w1, b1, w2, b2, w3, b3)


def reference_forward(x, t, params):
    """Pure-JAX replica of the PyTorch forward (weights in (out, in) layout)."""
    w1, b1, w2, b2, w3, b3 = params
    xt = jnp.concatenate([x, t], axis=1)                 # (N, 2)
    h1 = jax.nn.sigmoid(xt @ w1.T + b1)
    h2 = jnp.maximum(h1 @ w2.T + b2, 0.0)
    return h2 @ w3.T + b3


if __name__ == "__main__":
    key = jax.random.PRNGKey(0)
    kp, kd = jax.random.split(key)
    params = init_params(kp)

    # Cases: ragged single-step, near-tile single-step, and multi-step grid with
    # a ragged final block (exercises boundary masking on both reads & writes).
    for n, tile in [(200, 8192), (1000, 8192), (1300, 512)]:
        kx, kt = jax.random.split(jax.random.fold_in(kd, n))
        x = jax.random.uniform(kx, (n, 1), jnp.float32)
        t = jax.random.uniform(kt, (n, 1), jnp.float32)

        out = jax.block_until_ready(pinn_forward(x, t, params, tile_n=tile))
        ref = reference_forward(x, t, params)

        assert out.shape == (n, 1)
        assert jnp.allclose(out, ref, atol=1e-5, rtol=1e-5), f"mismatch vs reference (n={n})"

    print("KERNEL_OK")
</pallas_src>

<mosaic_0001>
module attributes {stable_mosaic.version = 11 : i64} {
  func.func @pinn_kernel(%arg0: i32, %arg1: memref<1x512xf32, #tpu.memory_space<vmem>>, %arg2: memref<1x512xf32, #tpu.memory_space<vmem>>, %arg3: memref<32x2xf32, #tpu.memory_space<vmem>>, %arg4: memref<32x1xf32, #tpu.memory_space<vmem>>, %arg5: memref<32x32xf32, #tpu.memory_space<vmem>>, %arg6: memref<32x1xf32, #tpu.memory_space<vmem>>, %arg7: memref<32x1xf32, #tpu.memory_space<vmem>>, %arg8: memref<1xf32, #tpu.memory_space<smem>>, %arg9: memref<1x512xf32, #tpu.memory_space<vmem>>) attributes {dimension_semantics = [#tpu.dimension_semantics<parallel>], iteration_bounds = array<i64: 1>, scalar_prefetch = 0 : i64, scratch_operands = 0 : i64, tpu.core_type = #tpu.core_type<tc>, window_params = [{transform_indices = @transform_0, window_bounds = array<i64: 1, 512>}, {transform_indices = @transform_1, window_bounds = array<i64: 1, 512>}, {pipeline_mode = #tpu.pipeline_mode<synchronous>, transform_indices = @transform_2, window_bounds = array<i64: 32, 2>}, {pipeline_mode = #tpu.pipeline_mode<synchronous>, transform_indices = @transform_3, window_bounds = array<i64: 32, 1>}, {pipeline_mode = #tpu.pipeline_mode<synchronous>, transform_indices = @transform_4, window_bounds = array<i64: 32, 32>}, {pipeline_mode = #tpu.pipeline_mode<synchronous>, transform_indices = @transform_5, window_bounds = array<i64: 32, 1>}, {pipeline_mode = #tpu.pipeline_mode<synchronous>, transform_indices = @transform_6, window_bounds = array<i64: 32, 1>}, {transform_indices = @transform_7, window_bounds = array<i64: 1>}, {transform_indices = @transform_8, window_bounds = array<i64: 1, 512>}]} {
    %c0 = arith.constant 0 : index
    %c0_0 = arith.constant 0 : index
    %0 = vector.load %arg3[%c0, %c0_0] : memref<32x2xf32, #tpu.memory_space<vmem>>, vector<32x2xf32>
    %1 = vector.extract_strided_slice %0 {offsets = [0, 0], sizes = [32, 1], strides = [1, 1]} : vector<32x2xf32> to vector<32x1xf32>
    %2 = vector.extract_strided_slice %0 {offsets = [0, 1], sizes = [32, 1], strides = [1, 1]} : vector<32x2xf32> to vector<32x1xf32>
    %c0_1 = arith.constant 0 : index
    %c0_2 = arith.constant 0 : index
    %3 = vector.load %arg4[%c0_1, %c0_2] : memref<32x1xf32, #tpu.memory_space<vmem>>, vector<32x1xf32>
    %c0_3 = arith.constant 0 : index
    %c0_4 = arith.constant 0 : index
    %4 = vector.load %arg5[%c0_3, %c0_4] : memref<32x32xf32, #tpu.memory_space<vmem>>, vector<32x32xf32>
    %c0_5 = arith.constant 0 : index
    %c0_6 = arith.constant 0 : index
    %5 = vector.load %arg6[%c0_5, %c0_6] : memref<32x1xf32, #tpu.memory_space<vmem>>, vector<32x1xf32>
    %c0_7 = arith.constant 0 : index
    %c0_8 = arith.constant 0 : index
    %6 = vector.load %arg7[%c0_7, %c0_8] : memref<32x1xf32, #tpu.memory_space<vmem>>, vector<32x1xf32>
    %c0_9 = arith.constant 0 : index
    %7 = memref.load %arg8[%c0_9] : memref<1xf32, #tpu.memory_space<smem>>
    %c0_i32 = arith.constant 0 : i32
    %c512_i32 = arith.constant 512 : i32
    %8 = arith.muli %c0_i32, %c512_i32 : i32
    %9 = tpu.assume_multiple %8, 512 : i32
    %c0_10 = arith.constant 0 : index
    %10 = arith.index_cast %9 : i32 to index
    %11 = vector.load %arg1[%c0_10, %10] : memref<1x512xf32, #tpu.memory_space<vmem>>, vector<1x512xf32>
    %c0_11 = arith.constant 0 : index
    %12 = arith.index_cast %9 : i32 to index
    %13 = vector.load %arg2[%c0_11, %12] : memref<1x512xf32, #tpu.memory_space<vmem>>, vector<1x512xf32>
    %14 = vector.broadcast %1 : vector<32x1xf32> to vector<32x512xf32>
    %15 = vector.broadcast %11 : vector<1x512xf32> to vector<32x512xf32>
    %16 = arith.mulf %14, %15 : vector<32x512xf32>
    %17 = vector.broadcast %2 : vector<32x1xf32> to vector<32x512xf32>
    %18 = vector.broadcast %13 : vector<1x512xf32> to vector<32x512xf32>
    %19 = arith.mulf %17, %18 : vector<32x512xf32>
    %20 = arith.addf %16, %19 : vector<32x512xf32>
    %21 = vector.broadcast %3 : vector<32x1xf32> to vector<32x512xf32>
    %22 = arith.addf %20, %21 : vector<32x512xf32>
    %23 = arith.negf %22 : vector<32x512xf32>
    %24 = math.exp %23 : vector<32x512xf32>
    %cst = arith.constant 1.000000e+00 : f32
    %25 = vector.broadcast %cst : f32 to vector<32x512xf32>
    %26 = arith.addf %25, %24 : vector<32x512xf32>
    %27 = arith.divf %25, %26 : vector<32x512xf32>
    %cst_12 = arith.constant dense<0.000000e+00> : vector<32x512xf32>
    %28 = tpu.matmul %4, %27, %cst_12 {dimension_numbers = #tpu.dot_dimension_numbers<[1], [0], [0], [1], [0, 0, 1, 1], [], []>} : vector<32x32xf32>, vector<32x512xf32>, vector<32x512xf32> -> vector<32x512xf32>
    %29 = vector.broadcast %5 : vector<32x1xf32> to vector<32x512xf32>
    %30 = arith.addf %28, %29 : vector<32x512xf32>
    %cst_13 = arith.constant 0.000000e+00 : f32
    %31 = vector.broadcast %cst_13 : f32 to vector<32x512xf32>
    %32 = arith.maximumf %30, %31 : vector<32x512xf32>
    %33 = vector.broadcast %6 : vector<32x1xf32> to vector<32x512xf32>
    %34 = arith.mulf %33, %32 : vector<32x512xf32>
    %cst_14 = arith.constant dense<0.000000e+00> : vector<512xf32>
    %35 = vector.multi_reduction <add>, %34, %cst_14 [0] : vector<32x512xf32> to vector<512xf32>
    %36 = vector.shape_cast %35 : vector<512xf32> to vector<1x512xf32>
    %37 = vector.broadcast %7 : f32 to vector<1x512xf32>
    %38 = arith.addf %36, %37 : vector<1x512xf32>
    %c0_15 = arith.constant 0 : index
    %39 = arith.index_cast %9 : i32 to index
    %40 = vector.load %arg9[%c0_15, %39] : memref<1x512xf32, #tpu.memory_space<vmem>>, vector<1x512xf32>
    tpu.vector_store %arg9[%c0_15, %39], %38 {strides = array<i32>} : memref<1x512xf32, #tpu.memory_space<vmem>>, vector<1x512xf32>,
    %c1_i32 = arith.constant 1 : i32
    return
  }
  func.func @transform_0(%arg0: i32) -> (i32, i32) {
    %c0_i32 = arith.constant 0 : i32
    %c0_i32_0 = arith.constant 0 : i32
    return %c0_i32, %arg0 : i32, i32
  }
  func.func @transform_1(%arg0: i32) -> (i32, i32) {
    %c0_i32 = arith.constant 0 : i32
    %c0_i32_0 = arith.constant 0 : i32
    return %c0_i32, %arg0 : i32, i32
  }
  func.func @transform_2(%arg0: i32) -> (i32, i32) {
    %c0_i32 = arith.constant 0 : i32
    %c0_i32_0 = arith.constant 0 : i32
    %c0_i32_1 = arith.constant 0 : i32
    return %c0_i32, %c0_i32_0 : i32, i32
  }
  func.func @transform_3(%arg0: i32) -> (i32, i32) {
    %c0_i32 = arith.constant 0 : i32
    %c0_i32_0 = arith.constant 0 : i32
    %c0_i32_1 = arith.constant 0 : i32
    return %c0_i32, %c0_i32_0 : i32, i32
  }
  func.func @transform_4(%arg0: i32) -> (i32, i32) {
    %c0_i32 = arith.constant 0 : i32
    %c0_i32_0 = arith.constant 0 : i32
    %c0_i32_1 = arith.constant 0 : i32
    return %c0_i32, %c0_i32_0 : i32, i32
  }
  func.func @transform_5(%arg0: i32) -> (i32, i32) {
    %c0_i32 = arith.constant 0 : i32
    %c0_i32_0 = arith.constant 0 : i32
    %c0_i32_1 = arith.constant 0 : i32
    return %c0_i32, %c0_i32_0 : i32, i32
  }
  func.func @transform_6(%arg0: i32) -> (i32, i32) {
    %c0_i32 = arith.constant 0 : i32
    %c0_i32_0 = arith.constant 0 : i32
    %c0_i32_1 = arith.constant 0 : i32
    return %c0_i32, %c0_i32_0 : i32, i32
  }
  func.func @transform_7(%arg0: i32) -> i32 {
    %c0_i32 = arith.constant 0 : i32
    %c0_i32_0 = arith.constant 0 : i32
    return %c0_i32 : i32
  }
  func.func @transform_8(%arg0: i32) -> (i32, i32) {
    %c0_i32 = arith.constant 0 : i32
    %c0_i32_0 = arith.constant 0 : i32
    return %c0_i32, %arg0 : i32, i32
  }
}

</mosaic_0001>

<llo_original>
// kernel: tpu_custom_call.1
$region0: #{tpu_custom_call.1}
  #allocation0 [shape = 'u32[]', space=smem, size = 0x4, offset = 0x4, fixed_abs, tag = 'smem constant byte address 0x4 - core index']
  #allocation1 [shape = 'u32[144,128]{1,0:T(1,128)}', space=vmem, size = 0x12000, scoped, tag = 'internal scratch']
  #allocation2 [shape = 'f32[1]{0:T(128)S(6)}', space=smem, size = 0x200, scoped, tag = 'scoped memory for tpu_custom_call.1']
  %s0 = inlined_call_operand.vmem [shape: f32[1,200], index: 0, kind: input, shape index: {}]
  %s1 = inlined_call_operand.vmem [shape: f32[1,200], index: 1, kind: input, shape index: {}]
  %s2 = inlined_call_operand.vmem [shape: f32[32,2], index: 2, kind: input, shape index: {}]
  %s3 = inlined_call_operand.vmem [shape: f32[32,1], index: 3, kind: input, shape index: {}]
  %s4 = inlined_call_operand.vmem [shape: f32[32,32], index: 4, kind: input, shape index: {}]
  %s5 = inlined_call_operand.vmem [shape: f32[32,1], index: 5, kind: input, shape index: {}]
  %s6 = inlined_call_operand.vmem [shape: f32[32,1], index: 6, kind: input, shape index: {}]
  %s7 = inlined_call_operand.<no memory space> [shape: f32[1], index: 7, kind: input, shape index: {}]
  %s8 = inlined_call_operand.hbm [shape: f32[1,200], index: 8, kind: output, shape index: {}]
  %s9 = sld [smem:[#allocation0]]
  $region42: #{tpu_custom_call.1} parent=0
    _
  %s11 = ssub.s32 1, %s9
  %s12 = scalar_select 0, %s11, %s9
  %13 = sst [smem:[#allocation2]] %s7
  $region1: #{tpu_custom_call.1} parent=0
    #allocation3 [shape = 'u8[2048]{0}', space=vmem, size = 0x800, scoped, tag = 'output window, operand 0, single buffered']
    #allocation4 [shape = 's32[1]{0}', space=sflag, size = 0x4, scoped, tag = 'scoped memory for tpu_custom_call.1']
    %14 = vsyncpa [#allocation4], 0
    // Predicated region
    $region2: #{tpu_custom_call.1} parent=1 // pred_check
      _
    $region3: #{tpu_custom_call.1} parent=1 // pred_check_branch
      %16 = sbr.rel (0) target = $region5
    $region4: #{tpu_custom_call.1} parent=1 // pred_region
      _
    $region5: #{tpu_custom_call.1} parent=1 // pred_fallthru
      _
    // Predicated region
    $region6: #{tpu_custom_call.1} parent=1 // pred_check
      _
    $region7: #{tpu_custom_call.1} parent=1 // pred_check_branch
      %18 = sbr.rel (0) target = $region9
    $region8: #{tpu_custom_call.1} parent=1 // pred_region
      _
    $region9: #{tpu_custom_call.1} parent=1 // pred_fallthru
      _
    // Predicated region
    $region10: #{tpu_custom_call.1} parent=1 // pred_check
      _
    $region11: #{tpu_custom_call.1} parent=1 // pred_check_branch
      %20 = sbr.rel (0) target = $region13
    $region12: #{tpu_custom_call.1} parent=1 // pred_region
      _
    $region13: #{tpu_custom_call.1} parent=1 // pred_fallthru
      _
    // Predicated region
    $region14: #{tpu_custom_call.1} parent=1 // pred_check
      _
    $region15: #{tpu_custom_call.1} parent=1 // pred_check_branch
      %22 = sbr.rel (0) target = $region17
    $region16: #{tpu_custom_call.1} parent=1 // pred_region
      _
    $region17: #{tpu_custom_call.1} parent=1 // pred_fallthru
      _
    // Predicated region
    $region18: #{tpu_custom_call.1} parent=1 // pred_check
      _
    $region19: #{tpu_custom_call.1} parent=1 // pred_check_branch
      %24 = sbr.rel (0) target = $region21
    $region20: #{tpu_custom_call.1} parent=1 // pred_region
      _
    $region21: #{tpu_custom_call.1} parent=1 // pred_fallthru
      _
    // Predicated region
    $region22: #{tpu_custom_call.1} parent=1 // pred_check
      _
    $region23: #{tpu_custom_call.1} parent=1 // pred_check_branch
      %26 = sbr.rel (0) target = $region25
    $region24: #{tpu_custom_call.1} parent=1 // pred_region
      _
    $region25: #{tpu_custom_call.1} parent=1 // pred_fallthru
      _
    // Predicated region
    $region26: #{tpu_custom_call.1} parent=1 // pred_check
      _
    $region27: #{tpu_custom_call.1} parent=1 // pred_check_branch
      %28 = sbr.rel (0) target = $region29
    $region28: #{tpu_custom_call.1} parent=1 // pred_region
      _
    $region29: #{tpu_custom_call.1} parent=1 // pred_fallthru
      _
    // Predicated region
    $region30: #{tpu_custom_call.1} parent=1 // pred_check
      _
    $region31: #{tpu_custom_call.1} parent=1 // pred_check_branch
      %30 = sbr.rel (0) target = $region33
    $region32: #{tpu_custom_call.1} parent=1 // pred_region
      _
    $region33: #{tpu_custom_call.1} parent=1 // pred_fallthru
      _
    %v31 = vld [vmem:[%s2] sm:$0xff]
    %v32 = vld [vmem:[%s2 + $0x8] sm:$0xff]
    %v33 = vld [vmem:[%s2 + $0x10] sm:$0xff]
    %v34 = vld [vmem:[%s2 + $0x18] sm:$0xff]
    %v35 = vld [vmem:[%s3] sm:$0xff]
    %v36 = vld [vmem:[%s3 + $0x8] sm:$0xff]
    %v37 = vld [vmem:[%s3 + $0x10] sm:$0xff]
    %v38 = vld [vmem:[%s3 + $0x18] sm:$0xff]
    %v39 = vld [vmem:[%s4] sm:$0xff]
    %v40 = vld [vmem:[%s4 + $0x8] sm:$0xff]
    %v41 = vld [vmem:[%s4 + $0x10] sm:$0xff]
    %v42 = vld [vmem:[%s4 + $0x18] sm:$0xff]
    %v43 = vld [vmem:[%s5] sm:$0xff]
    %v44 = vld [vmem:[%s5 + $0x8] sm:$0xff]
    %v45 = vld [vmem:[%s5 + $0x10] sm:$0xff]
    %v46 = vld [vmem:[%s5 + $0x18] sm:$0xff]
    %v47 = vld [vmem:[%s6] sm:$0xff]
    %v48 = vld [vmem:[%s6 + $0x8] sm:$0xff]
    %v49 = vld [vmem:[%s6 + $0x10] sm:$0xff]
    %v50 = vld [vmem:[%s6 + $0x18] sm:$0xff]
    %s51 = sld [smem:[#allocation2]]
    %v52 = vld [vmem:[%s0] sm:$0xf]
    %v53 = vld [vmem:[%s1] sm:$0xf]
    %55 = vset.pattern.permute.xlu0 0
    %56 = vperm.xlu0 %55, %v31
    %v57 = vpop.permute.xlu0 %56
    %60 = vset.pattern.permute.xlu0 0
    %61 = vperm.xlu0 %60, %v32
    %v62 = vpop.permute.xlu0 %61
    %65 = vset.pattern.permute.xlu0 0
    %66 = vperm.xlu0 %65, %v33
    %v67 = vpop.permute.xlu0 %66
    %70 = vset.pattern.permute.xlu0 0
    %71 = vperm.xlu0 %70, %v34
    %v72 = vpop.permute.xlu0 %71
    %v75 = vlaneseq
    %v76 = vshrl.u32 %v75, 7
    %v77 = vsub.s32 0, %v76
    %v78 = vrot.slane %v52, %v77
    %v79 = vlaneseq
    %v80 = vshrl.u32 %v79, 7
    %v81 = vsub.s32 1, %v80
    %v82 = vrot.slane %v52, %v81
    %v83 = vlaneseq
    %v84 = vshrl.u32 %v83, 7
    %v85 = vsub.s32 2, %v84
    %v86 = vrot.slane %v52, %v85
    %v87 = vlaneseq
    %v88 = vshrl.u32 %v87, 7
    %v89 = vsub.s32 3, %v88
    %v90 = vrot.slane %v52, %v89
    %v95 = vmul.f32 %v57, %v78
    %v96 = vmul.f32 %v57, %v82
    %v97 = vmul.f32 %v57, %v86
    %v98 = vmul.f32 %v57, %v90
    %v99 = vmul.f32 %v62, %v78
    %v100 = vmul.f32 %v62, %v82
    %v101 = vmul.f32 %v62, %v86
    %v102 = vmul.f32 %v62, %v90
    %v103 = vmul.f32 %v67, %v78
    %v104 = vmul.f32 %v67, %v82
    %v105 = vmul.f32 %v67, %v86
    %v106 = vmul.f32 %v67, %v90
    %v107 = vmul.f32 %v72, %v78
    %v108 = vmul.f32 %v72, %v82
    %v109 = vmul.f32 %v72, %v86
    %v110 = vmul.f32 %v72, %v90
    %111 = vset.pattern.permute.xlu0 1
    %112 = vperm.xlu0 %111, %v31
    %v113 = vpop.permute.xlu0 %112
    %115 = vset.pattern.permute.xlu0 1
    %116 = vperm.xlu0 %115, %v32
    %v117 = vpop.permute.xlu0 %116
    %119 = vset.pattern.permute.xlu0 1
    %120 = vperm.xlu0 %119, %v33
    %v121 = vpop.permute.xlu0 %120
    %123 = vset.pattern.permute.xlu0 1
    %124 = vperm.xlu0 %123, %v34
    %v125 = vpop.permute.xlu0 %124
    %v128 = vlaneseq
    %v129 = vshrl.u32 %v128, 7
    %v130 = vsub.s32 0, %v129
    %v131 = vrot.slane %v53, %v130
    %v132 = vlaneseq
    %v133 = vshrl.u32 %v132, 7
    %v134 = vsub.s32 1, %v133
    %v135 = vrot.slane %v53, %v134
    %v136 = vlaneseq
    %v137 = vshrl.u32 %v136, 7
    %v138 = vsub.s32 2, %v137
    %v139 = vrot.slane %v53, %v138
    %v140 = vlaneseq
    %v141 = vshrl.u32 %v140, 7
    %v142 = vsub.s32 3, %v141
    %v143 = vrot.slane %v53, %v142
    %v148 = vmul.f32 %v113, %v131
    %v149 = vmul.f32 %v113, %v135
    %v150 = vmul.f32 %v113, %v139
    %v151 = vmul.f32 %v113, %v143
    %v152 = vmul.f32 %v117, %v131
    %v153 = vmul.f32 %v117, %v135
    %v154 = vmul.f32 %v117, %v139
    %v155 = vmul.f32 %v117, %v143
    %v156 = vmul.f32 %v121, %v131
    %v157 = vmul.f32 %v121, %v135
    %v158 = vmul.f32 %v121, %v139
    %v159 = vmul.f32 %v121, %v143
    %v160 = vmul.f32 %v125, %v131
    %v161 = vmul.f32 %v125, %v135
    %v162 = vmul.f32 %v125, %v139
    %v163 = vmul.f32 %v125, %v143
    %v164 = vadd.f32 %v95, %v148
    %v165 = vadd.f32 %v96, %v149
    %v166 = vadd.f32 %v97, %v150
    %v167 = vadd.f32 %v98, %v151
    %v168 = vadd.f32 %v99, %v152
    %v169 = vadd.f32 %v100, %v153
    %v170 = vadd.f32 %v101, %v154
    %v171 = vadd.f32 %v102, %v155
    %v172 = vadd.f32 %v103, %v156
    %v173 = vadd.f32 %v104, %v157
    %v174 = vadd.f32 %v105, %v158
    %v175 = vadd.f32 %v106, %v159
    %v176 = vadd.f32 %v107, %v160
    %v177 = vadd.f32 %v108, %v161
    %v178 = vadd.f32 %v109, %v162
    %v179 = vadd.f32 %v110, %v163
    %181 = vset.pattern.permute.xlu0 0
    %182 = vperm.xlu0 %181, %v35
    %v183 = vpop.permute.xlu0 %182
    %186 = vset.pattern.permute.xlu0 0
    %187 = vperm.xlu0 %186, %v36
    %v188 = vpop.permute.xlu0 %187
    %191 = vset.pattern.permute.xlu0 0
    %192 = vperm.xlu0 %191, %v37
    %v193 = vpop.permute.xlu0 %192
    %196 = vset.pattern.permute.xlu0 0
    %197 = vperm.xlu0 %196, %v38
    %v198 = vpop.permute.xlu0 %197
    %v200 = vadd.f32 %v164, %v183
    %v201 = vadd.f32 %v165, %v183
    %v202 = vadd.f32 %v166, %v183
    %v203 = vadd.f32 %v167, %v183
    %v204 = vadd.f32 %v168, %v188
    %v205 = vadd.f32 %v169, %v188
    %v206 = vadd.f32 %v170, %v188
    %v207 = vadd.f32 %v171, %v188
    %v208 = vadd.f32 %v172, %v193
    %v209 = vadd.f32 %v173, %v193
    %v210 = vadd.f32 %v174, %v193
    %v211 = vadd.f32 %v175, %v193
    %v212 = vadd.f32 %v176, %v198
    %v213 = vadd.f32 %v177, %v198
    %v214 = vadd.f32 %v178, %v198
    %v215 = vadd.f32 %v179, %v198
    %v216 = vxor.u32 %v200, 2147483648
    %v217 = vxor.u32 %v201, 2147483648
    %v218 = vxor.u32 %v202, 2147483648
    %v219 = vxor.u32 %v203, 2147483648
    %v220 = vxor.u32 %v204, 2147483648
    %v221 = vxor.u32 %v205, 2147483648
    %v222 = vxor.u32 %v206, 2147483648
    %v223 = vxor.u32 %v207, 2147483648
    %v224 = vxor.u32 %v208, 2147483648
    %v225 = vxor.u32 %v209, 2147483648
    %v226 = vxor.u32 %v210, 2147483648
    %v227 = vxor.u32 %v211, 2147483648
    %v228 = vxor.u32 %v212, 2147483648
    %v229 = vxor.u32 %v213, 2147483648
    %v230 = vxor.u32 %v214, 2147483648
    %v231 = vxor.u32 %v215, 2147483648
    %v232 = vmul.f32 %v216, 1.442695
    %v233 = vpow.pop %v232
    %v234 = vmul.f32 %v217, 1.442695
    %v235 = vpow.pop %v234
    %v236 = vmul.f32 %v218, 1.442695
    %v237 = vpow.pop %v236
    %v238 = vmul.f32 %v219, 1.442695
    %v239 = vpow.pop %v238
    %v240 = vmul.f32 %v220, 1.442695
    %v241 = vpow.pop %v240
    %v242 = vmul.f32 %v221, 1.442695
    %v243 = vpow.pop %v242
    %v244 = vmul.f32 %v222, 1.442695
    %v245 = vpow.pop %v244
    %v246 = vmul.f32 %v223, 1.442695
    %v247 = vpow.pop %v246
    %v248 = vmul.f32 %v224, 1.442695
    %v249 = vpow.pop %v248
    %v250 = vmul.f32 %v225, 1.442695
    %v251 = vpow.pop %v250
    %v252 = vmul.f32 %v226, 1.442695
    %v253 = vpow.pop %v252
    %v254 = vmul.f32 %v227, 1.442695
    %v255 = vpow.pop %v254
    %v256 = vmul.f32 %v228, 1.442695
    %v257 = vpow.pop %v256
    %v258 = vmul.f32 %v229, 1.442695
    %v259 = vpow.pop %v258
    %v260 = vmul.f32 %v230, 1.442695
    %v261 = vpow.pop %v260
    %v262 = vmul.f32 %v231, 1.442695
    %v263 = vpow.pop %v262
    %v264 = vadd.f32 %v233, 1.0
    %v265 = vadd.f32 %v235, 1.0
    %v266 = vadd.f32 %v237, 1.0
    %v267 = vadd.f32 %v239, 1.0
    %v268 = vadd.f32 %v241, 1.0
    %v269 = vadd.f32 %v243, 1.0
    %v270 = vadd.f32 %v245, 1.0
    %v271 = vadd.f32 %v247, 1.0
    %v272 = vadd.f32 %v249, 1.0
    %v273 = vadd.f32 %v251, 1.0
    %v274 = vadd.f32 %v253, 1.0
    %v275 = vadd.f32 %v255, 1.0
    %v276 = vadd.f32 %v257, 1.0
    %v277 = vadd.f32 %v259, 1.0
    %v278 = vadd.f32 %v261, 1.0
    %v279 = vadd.f32 %v263, 1.0
    %v280 = vrcp.pop %v264
    %v281 = vmul.f32 1.0, %v280
    %v282 = vrcp.pop %v265
    %v283 = vmul.f32 1.0, %v282
    %v284 = vrcp.pop %v266
    %v285 = vmul.f32 1.0, %v284
    %v286 = vrcp.pop %v267
    %v287 = vmul.f32 1.0, %v286
    %v288 = vrcp.pop %v268
    %v289 = vmul.f32 1.0, %v288
    %v290 = vrcp.pop %v269
    %v291 = vmul.f32 1.0, %v290
    %v292 = vrcp.pop %v270
    %v293 = vmul.f32 1.0, %v292
    %v294 = vrcp.pop %v271
    %v295 = vmul.f32 1.0, %v294
    %v296 = vrcp.pop %v272
    %v297 = vmul.f32 1.0, %v296
    %v298 = vrcp.pop %v273
    %v299 = vmul.f32 1.0, %v298
    %v300 = vrcp.pop %v274
    %v301 = vmul.f32 1.0, %v300
    %v302 = vrcp.pop %v275
    %v303 = vmul.f32 1.0, %v302
    %v304 = vrcp.pop %v276
    %v305 = vmul.f32 1.0, %v304
    %v306 = vrcp.pop %v277
    %v307 = vmul.f32 1.0, %v306
    %v308 = vrcp.pop %v278
    %v309 = vmul.f32 1.0, %v308
    %v310 = vrcp.pop %v279
    %v311 = vmul.f32 1.0, %v310
    %313 = vset.pattern.permute.xlu0 0
    %314 = vperm.xlu0 %313, %v43
    %v315 = vpop.permute.xlu0 %314
    %318 = vset.pattern.permute.xlu0 0
    %319 = vperm.xlu0 %318, %v44
    %v320 = vpop.permute.xlu0 %319
    %323 = vset.pattern.permute.xlu0 0
    %324 = vperm.xlu0 %323, %v45
    %v325 = vpop.permute.xlu0 %324
    %328 = vset.pattern.permute.xlu0 0
    %329 = vperm.xlu0 %328, %v46
    %v330 = vpop.permute.xlu0 %329
    %vm332 = vcmask 261120
    %v334 = vsel %vm332, %v39, 0
    %v337 = vsel %vm332, %v40, 0
    %v340 = vsel %vm332, %v41, 0
    %v343 = vsel %vm332, %v42, 0
    %345 = vmatprep.subr.mxu0 0.0
    %346 = vmatpush1.msra.mxu0 0.0
    %347 = vmatprep.subr.mxu0 0.0
    %348 = vmatpush1.msra.mxu0 0.0
    %349 = vmatprep.subr.mxu0 0.0
    %350 = vmatpush1.msra.mxu0 0.0
    %351 = vmatprep.subr.mxu0 0.0
    %352 = vmatpush1.msra.mxu0 0.0
    %353 = vmatprep.subr.mxu0 0.0
    %354 = vmatpush1.msra.mxu0 0.0
    %355 = vmatprep.subr.mxu0 0.0
    %356 = vmatpush1.msra.mxu0 0.0
    %357 = vmatprep.subr.mxu0 0.0
    %358 = vmatpush1.msra.mxu0 0.0
    %359 = vmatprep.subr.mxu0 0.0
    %360 = vmatpush1.msra.mxu0 0.0
    %361 = vmatprep.subr.mxu0 0.0
    %362 = vmatpush1.msra.mxu0 0.0
    %363 = vmatprep.subr.mxu0 0.0
    %364 = vmatpush1.msra.mxu0 0.0
    %365 = vmatprep.subr.mxu0 0.0
    %366 = vmatpush1.msra.mxu0 0.0
    %367 = vmatprep.subr.mxu0 0.0
    %368 = vmatpush1.msra.mxu0 0.0
    %369 = vmatprep.subr.mxu0 %v307
    %370 = vmatpush1.msra.mxu0 %v305
    %371 = vmatprep.subr.mxu0 %v299
    %372 = vmatpush1.msra.mxu0 %v297
    %373 = vmatprep.subr.mxu0 %v291
    %374 = vmatpush1.msra.mxu0 %v289
    %375 = vmatprep.subr.mxu0 %v283
    %376 = vmatpush1.msra.mxu0 %v281
    %377 = vmatprep.subr.mxu0 0.0
    %378 = vmatpush2.msra.mxu0 0.0
    %379 = vmatprep.subr.mxu0 0.0
    %380 = vmatpush2.msra.mxu0 0.0
    %381 = vmatprep.subr.mxu0 0.0
    %382 = vmatpush2.msra.mxu0 0.0
    %383 = vmatprep.subr.mxu0 0.0
    %384 = vmatpush2.msra.mxu0 0.0
    %385 = vmatprep.subr.mxu0 0.0
    %386 = vmatpush2.msra.mxu0 0.0
    %387 = vmatprep.subr.mxu0 0.0
    %388 = vmatpush2.msra.mxu0 0.0
    %389 = vmatprep.subr.mxu0 0.0
    %390 = vmatpush2.msra.mxu0 0.0
    %391 = vmatprep.subr.mxu0 0.0
    %392 = vmatpush2.msra.mxu0 0.0
    %393 = vmatprep.subr.mxu0 0.0
    %394 = vmatpush2.msra.mxu0 0.0
    %395 = vmatprep.subr.mxu0 0.0
    %396 = vmatpush2.msra.mxu0 0.0
    %397 = vmatprep.subr.mxu0 0.0
    %398 = vmatpush2.msra.mxu0 0.0
    %399 = vmatprep.subr.mxu0 0.0
    %400 = vmatpush2.msra.mxu0 0.0
    %401 = vmatprep.subr.mxu0 0.0
    %402 = vmatpush2.msra.mxu0 0.0
    %403 = vmatprep.subr.mxu0 0.0
    %404 = vmatpush2.msra.mxu0 0.0
    %405 = vmatprep.subr.mxu0 0.0
    %406 = vmatpush2.msra.mxu0 0.0
    %407 = vmatprep.subr.mxu0 0.0
    %408 = vmatpush2.msra.mxu0 0.0
    %409 = vmatprep.mubr.f32.mxu0 0.0
    %410 = vmatmul.mubr.f32.gmra.mxu0 %v334
    %v411 = vpop.f32.mrf.mxu0
    %v412 = vadd.f32 %v315, %v411
    %v413 = vpop.f32.mrf.mxu0
    %v414 = vadd.f32 %v315, %v413
    %415 = vmatprep.mubr.f32.mxu0 0.0
    %416 = vmatmul.mubr.f32.gmra.mxu0 %v337
    %v417 = vpop.f32.mrf.mxu0
    %v418 = vadd.f32 %v320, %v417
    %v419 = vpop.f32.mrf.mxu0
    %v420 = vadd.f32 %v320, %v419
    %421 = vmatprep.mubr.f32.mxu0 0.0
    %422 = vmatmul.mubr.f32.gmra.mxu0 %v340
    %v423 = vpop.f32.mrf.mxu0
    %v424 = vadd.f32 %v325, %v423
    %v425 = vpop.f32.mrf.mxu0
    %v426 = vadd.f32 %v325, %v425
    %427 = vmatprep.mubr.f32.mxu0 0.0
    %428 = vmatmul.mubr.f32.gmra.mxu0 %v343
    %v429 = vpop.f32.mrf.mxu0
    %v430 = vadd.f32 %v330, %v429
    %v431 = vpop.f32.mrf.mxu0
    %v432 = vadd.f32 %v330, %v431
    %433 = vdwg.mxu0
    %434 = vmatprep.subr.mxu0 0.0
    %435 = vmatpush1.msra.mxu0 0.0
    %436 = vmatprep.subr.mxu0 0.0
    %437 = vmatpush1.msra.mxu0 0.0
    %438 = vmatprep.subr.mxu0 0.0
    %439 = vmatpush1.msra.mxu0 0.0
    %440 = vmatprep.subr.mxu0 0.0
    %441 = vmatpush1.msra.mxu0 0.0
    %442 = vmatprep.subr.mxu0 0.0
    %443 = vmatpush1.msra.mxu0 0.0
    %444 = vmatprep.subr.mxu0 0.0
    %445 = vmatpush1.msra.mxu0 0.0
    %446 = vmatprep.subr.mxu0 0.0
    %447 = vmatpush1.msra.mxu0 0.0
    %448 = vmatprep.subr.mxu0 0.0
    %449 = vmatpush1.msra.mxu0 0.0
    %450 = vmatprep.subr.mxu0 0.0
    %451 = vmatpush1.msra.mxu0 0.0
    %452 = vmatprep.subr.mxu0 0.0
    %453 = vmatpush1.msra.mxu0 0.0
    %454 = vmatprep.subr.mxu0 0.0
    %455 = vmatpush1.msra.mxu0 0.0
    %456 = vmatprep.subr.mxu0 0.0
    %457 = vmatpush1.msra.mxu0 0.0
    %458 = vmatprep.subr.mxu0 %v311
    %459 = vmatpush1.msra.mxu0 %v309
    %460 = vmatprep.subr.mxu0 %v303
    %461 = vmatpush1.msra.mxu0 %v301
    %462 = vmatprep.subr.mxu0 %v295
    %463 = vmatpush1.msra.mxu0 %v293
    %464 = vmatprep.subr.mxu0 %v287
    %465 = vmatpush1.msra.mxu0 %v285
    %466 = vmatprep.subr.mxu0 0.0
    %467 = vmatpush2.msra.mxu0 0.0
    %468 = vmatprep.subr.mxu0 0.0
    %469 = vmatpush2.msra.mxu0 0.0
    %470 = vmatprep.subr.mxu0 0.0
    %471 = vmatpush2.msra.mxu0 0.0
    %472 = vmatprep.subr.mxu0 0.0
    %473 = vmatpush2.msra.mxu0 0.0
    %474 = vmatprep.subr.mxu0 0.0
    %475 = vmatpush2.msra.mxu0 0.0
    %476 = vmatprep.subr.mxu0 0.0
    %477 = vmatpush2.msra.mxu0 0.0
    %478 = vmatprep.subr.mxu0 0.0
    %479 = vmatpush2.msra.mxu0 0.0
    %480 = vmatprep.subr.mxu0 0.0
    %481 = vmatpush2.msra.mxu0 0.0
    %482 = vmatprep.subr.mxu0 0.0
    %483 = vmatpush2.msra.mxu0 0.0
    %484 = vmatprep.subr.mxu0 0.0
    %485 = vmatpush2.msra.mxu0 0.0
    %486 = vmatprep.subr.mxu0 0.0
    %487 = vmatpush2.msra.mxu0 0.0
    %488 = vmatprep.subr.mxu0 0.0
    %489 = vmatpush2.msra.mxu0 0.0
    %490 = vmatprep.subr.mxu0 0.0
    %491 = vmatpush2.msra.mxu0 0.0
    %492 = vmatprep.subr.mxu0 0.0
    %493 = vmatpush2.msra.mxu0 0.0
    %494 = vmatprep.subr.mxu0 0.0
    %495 = vmatpush2.msra.mxu0 0.0
    %496 = vmatprep.subr.mxu0 0.0
    %497 = vmatpush2.msra.mxu0 0.0
    %498 = vmatprep.mubr.f32.mxu0 0.0
    %499 = vmatmul.mubr.f32.gmra.mxu0 %v334
    %v500 = vpop.f32.mrf.mxu0
    %v501 = vadd.f32 %v315, %v500
    %v502 = vpop.f32.mrf.mxu0
    %v503 = vadd.f32 %v315, %v502
    %504 = vmatprep.mubr.f32.mxu0 0.0
    %505 = vmatmul.mubr.f32.gmra.mxu0 %v337
    %v506 = vpop.f32.mrf.mxu0
    %v507 = vadd.f32 %v320, %v506
    %v508 = vpop.f32.mrf.mxu0
    %v509 = vadd.f32 %v320, %v508
    %510 = vmatprep.mubr.f32.mxu0 0.0
    %511 = vmatmul.mubr.f32.gmra.mxu0 %v340
    %v512 = vpop.f32.mrf.mxu0
    %v513 = vadd.f32 %v325, %v512
    %v514 = vpop.f32.mrf.mxu0
    %v515 = vadd.f32 %v325, %v514
    %516 = vmatprep.mubr.f32.mxu0 0.0
    %517 = vmatmul.mubr.f32.gmra.mxu0 %v343
    %v518 = vpop.f32.mrf.mxu0
    %v519 = vadd.f32 %v330, %v518
    %v520 = vpop.f32.mrf.mxu0
    %v521 = vadd.f32 %v330, %v520
    %522 = vdwg.mxu0
    %v523 = vmax.f32 %v412, 0.0
    %v524 = vmax.f32 %v414, 0.0
    %v525 = vmax.f32 %v501, 0.0
    %v526 = vmax.f32 %v503, 0.0
    %v527 = vmax.f32 %v418, 0.0
    %v528 = vmax.f32 %v420, 0.0
    %v529 = vmax.f32 %v507, 0.0
    %v530 = vmax.f32 %v509, 0.0
    %v531 = vmax.f32 %v424, 0.0
    %v532 = vmax.f32 %v426, 0.0
    %v533 = vmax.f32 %v513, 0.0
    %v534 = vmax.f32 %v515, 0.0
    %v535 = vmax.f32 %v430, 0.0
    %v536 = vmax.f32 %v432, 0.0
    %v537 = vmax.f32 %v519, 0.0
    %v538 = vmax.f32 %v521, 0.0
    %540 = vset.pattern.permute.xlu0 0
    %541 = vperm.xlu0 %540, %v47
    %v542 = vpop.permute.xlu0 %541
    %545 = vset.pattern.permute.xlu0 0
    %546 = vperm.xlu0 %545, %v48
    %v547 = vpop.permute.xlu0 %546
    %550 = vset.pattern.permute.xlu0 0
    %551 = vperm.xlu0 %550, %v49
    %v552 = vpop.permute.xlu0 %551
    %555 = vset.pattern.permute.xlu0 0
    %556 = vperm.xlu0 %555, %v50
    %v557 = vpop.permute.xlu0 %556
    %v559 = vmul.f32 %v542, %v523
    %v560 = vmul.f32 %v542, %v524
    %v561 = vmul.f32 %v542, %v525
    %v562 = vmul.f32 %v542, %v526
    %v563 = vmul.f32 %v547, %v527
    %v564 = vmul.f32 %v547, %v528
    %v565 = vmul.f32 %v547, %v529
    %v566 = vmul.f32 %v547, %v530
    %v567 = vmul.f32 %v552, %v531
    %v568 = vmul.f32 %v552, %v532
    %v569 = vmul.f32 %v552, %v533
    %v570 = vmul.f32 %v552, %v534
    %v571 = vmul.f32 %v557, %v535
    %v572 = vmul.f32 %v557, %v536
    %v573 = vmul.f32 %v557, %v537
    %v574 = vmul.f32 %v557, %v538
    %v575 = vadd.f32 %v559, %v563
    %v576 = vadd.f32 %v575, %v567
    %v577 = vadd.f32 %v576, %v571
    %v578 = vrot.slane %v577, 4
    %v579 = vadd.f32 %v577, %v578
    %v580 = vrot.slane %v579, 2
    %v581 = vadd.f32 %v579, %v580
    %v582 = vrot.slane %v581, 1
    %v583 = vadd.f32 %v581, %v582
    %v584 = vadd.f32 %v560, %v564
    %v585 = vadd.f32 %v584, %v568
    %v586 = vadd.f32 %v585, %v572
    %v587 = vrot.slane %v586, 4
    %v588 = vadd.f32 %v586, %v587
    %v589 = vrot.slane %v588, 2
    %v590 = vadd.f32 %v588, %v589
    %v591 = vrot.slane %v590, 1
    %v592 = vadd.f32 %v590, %v591
    %v593 = vadd.f32 %v561, %v565
    %v594 = vadd.f32 %v593, %v569
    %v595 = vadd.f32 %v594, %v573
    %v596 = vrot.slane %v595, 4
    %v597 = vadd.f32 %v595, %v596
    %v598 = vrot.slane %v597, 2
    %v599 = vadd.f32 %v597, %v598
    %v600 = vrot.slane %v599, 1
    %v601 = vadd.f32 %v599, %v600
    %v602 = vadd.f32 %v562, %v566
    %v603 = vadd.f32 %v602, %v570
    %v604 = vadd.f32 %v603, %v574
    %v605 = vrot.slane %v604, 4
    %v606 = vadd.f32 %v604, %v605
    %v607 = vrot.slane %v606, 2
    %v608 = vadd.f32 %v606, %v607
    %v609 = vrot.slane %v608, 1
    %v610 = vadd.f32 %v608, %v609
    %v611 = vstv %s51
    %v612 = vadd.f32 %v583, %v611
    %v613 = vadd.f32 %v592, %v611
    %v614 = vadd.f32 %v601, %v611
    %v615 = vadd.f32 %v610, %v611
    %v620 = vcombine.low %v612, %v613
    %v621 = vcombine.low %v614, %v615
    %v623 = vunpack.c.l.s4 1966171168
    %v624 = vunpack.c.0.s8 %v623
    %v625 = vlaneseq
    %v626 = vshrl.u32 %v625, 7
    %v627 = vsub.s32 %v624, %v626
    %v628 = vrot.slane %v620, %v627
    %v630 = vunpack.c.l.s4 1966171168
    %v631 = vunpack.c.0.s8 %v630
    %v632 = vlaneseq
    %v633 = vshrl.u32 %v632, 7
    %v634 = vsub.s32 %v631, %v633
    %v635 = vrot.slane %v621, %v634
    %v636 = vcombine.low %v628, %v635
    %v638 = vunpack.c.l.s4 1966171168
    %v639 = vunpack.c.0.s8 %v638
    %v640 = vlaneseq
    %v641 = vshrl.u32 %v640, 7
    %v642 = vsub.s32 %v639, %v641
    %v643 = vrot.slane %v636, %v642
    %v645 = vlaneseq
    %vm646 = vcmp.ge.s32.totalorder %v645, 0
    %vm647 = vcmp.lt.s32.totalorder %v645, 512
    %vm648 = vmand %vm646, %vm647
    %649 = vst.msk [vmem:[#allocation3] sm:$0xf] %vm648, %v643
    // Predicated region
    $region34: #{tpu_custom_call.1} parent=1 // pred_check
      _
    $region35: #{tpu_custom_call.1} parent=1 // pred_check_branch
      %651 = sbr.rel (0) target = $region37
    $region36: #{tpu_custom_call.1} parent=1 // pred_region
      %s653 = ssub.s32 64, 32
      %654 = vsyncadd [#allocation4], %s653
      %s656 = sshll.u32 [#allocation3], 4
      %s657 = int_to_ptr.vmem [resolvable:$true] %s656
      %659 = dma.vmem_to_hbm [thread:$0]  %s657, 32, %s8, [#allocation4]
    $region37: #{tpu_custom_call.1} parent=1 // pred_fallthru
      _
    // Predicated region
    $region38: #{tpu_custom_call.1} parent=1 // pred_check
      _
    $region39: #{tpu_custom_call.1} parent=1 // pred_check_branch
      %661 = sbr.rel (0) target = $region41
    $region40: #{tpu_custom_call.1} parent=1 // pred_region
      %662 = dma.done [#allocation4], 64
    $region41: #{tpu_custom_call.1} parent=1 // pred_fallthru
      _
    %663 = vsyncpa [#allocation4], 1

</llo_original>
